<compile_context>
chip_gen: v7x
topology: tpu7x:2x2x1
jax: 0.10.0
libtpu: 0.0.40
codegen_flags: <defaults>
</compile_context>

<pallas_src>
import functools

import jax
import jax.numpy as jnp
from jax.experimental import pallas as pl
from jax.experimental.pallas import tpu as pltpu


def _residual_dwconvbn_kernel(H, C, TH, x_ref, w_ref, b_ref, o_ref):
    """One (batch, H-tile) grid step.

    x_ref : (1, H, F)   whole image (F = W*C on the lane axis), resident
                        across the H-tile grid axis (same block index).
    w_ref : (9, F)      depthwise taps (row = kh*3+kw), BN-scale folded,
                        W-tiled, wrapped W-boundary taps already zeroed.
    b_ref : (1, F)      fused BN bias, W-tiled.
    o_ref : (1, TH, F)  output tile (global rows [t*TH, (t+1)*TH)).
    """
    F = x_ref.shape[-1]
    nT = H // TH                         # static python int
    t = pl.program_id(1)
    r0 = pl.multiple_of(t * TH, 8)       # first row of this tile (aligned)

    xc = x_ref[0, pl.ds(r0, TH), :].astype(jnp.float32)        # (TH, F)
    # TODO(synk): on v6e/v7x with bf16 activations keep the 9 tap multiplies
    # in bf16 and accumulate in f32 (halves tap-temporary vreg footprint);
    # keep f32 on v5e (no bf16 VPU).
    w = w_ref[...].astype(jnp.float32)                         # (9, F)
    bias = b_ref[...].astype(jnp.float32)                      # (1, F)

    # dh = -1/+1 taps: sublane roll; a (TH,1) 0/1 mask zeroes the wrapped row
    # (row 0 / row TH-1).  The true neighbour row is added back below as a
    # 1-row halo fix-up (and is exactly zero at the image border).
    ri = jax.lax.broadcasted_iota(jnp.int32, (TH, 1), 0)
    m_top = (ri >= 1).astype(jnp.float32)
    m_bot = (ri < TH - 1).astype(jnp.float32)
    x_hm1 = pltpu.roll(xc, 1, 0) * m_top                       # x[h-1]
    x_hp1 = pltpu.roll(xc, TH - 1, 0) * m_bot                  # x[h+1]

    # Per-dw column sums; w rows: kh*3+kw with kh/kw in {0,1,2} <-> {-1,0,+1}.
    s_m1 = x_hm1 * w[0] + xc * w[3] + x_hp1 * w[6]
    s_0 = x_hm1 * w[1] + xc * w[4] + x_hp1 * w[7]
    s_p1 = x_hm1 * w[2] + xc * w[5] + x_hp1 * w[8]

    # dw = -1/+1: lane roll by +-C.  No masks: the taps feeding the wrapped
    # columns were zeroed in the weights, so the wrap-around contributes 0.
    # TODO(synk): verify the lane roll for shapes with W*C % 128 != 0.
    left = pltpu.roll(s_m1, C, 1)        # out[., w] += s_m1[., w-1]
    right = pltpu.roll(s_p1, F - C, 1)   # out[., w] += s_p1[., w+1]

    y = xc + s_0 + left + right + bias   # residual + conv + fused BN
    o_ref[0] = y.astype(o_ref.dtype)

    if nT > 1:
        # Halo fix-up: global row r0-1 feeds only output row 0 (dh=-1 taps)
        # and row r0+TH feeds only output row TH-1 (dh=+1 taps).  Rows are
        # read from the resident VMEM image via 8-row-aligned windows; at the
        # image border the (clamped, wrong) row is multiplied by 0.
        pg = pl.multiple_of(jnp.maximum(r0 - 8, 0), 8)
        ng = pl.multiple_of(jnp.minimum(r0 + TH, H - 8), 8)
        prev = x_ref[0, pl.ds(pg, 8), :][7:8].astype(jnp.float32)   # (1, F)
        nxt = x_ref[0, pl.ds(ng, 8), :][0:1].astype(jnp.float32)    # (1, F)
        prev = prev * (t > 0).astype(jnp.float32)
        nxt = nxt * (t < nT - 1).astype(jnp.float32)

        fix0 = (pltpu.roll(prev * w[0], C, 1) + prev * w[1]
                + pltpu.roll(prev * w[2], F - C, 1))
        fixL = (pltpu.roll(nxt * w[6], C, 1) + nxt * w[7]
                + pltpu.roll(nxt * w[8], F - C, 1))
        o_ref[0, 0:1, :] = (y[0:1] + fix0).astype(o_ref.dtype)
        o_ref[0, TH - 1:TH, :] = (y[TH - 1:TH] + fixL).astype(o_ref.dtype)


def _pick_block_h(H):
    for th in (32, 16, 8):
        if H % th == 0:
            return th
    return H


def residual_convbn_nhwc(x_nhwc, dw_weight, gamma, beta, running_mean,
                         running_var, eps=1e-5, block_h=None):
    """out = x + BN(dwconv3x3(x)).  x_nhwc: (B,H,W,C); dw_weight: (C,1,3,3)."""
    B, H, W, C = x_nhwc.shape
    F = W * C

    TH = _pick_block_h(H) if block_h is None else block_h
    if H % TH != 0 or (TH % 8 != 0 and TH != H):
        TH = H                      # fall back to one tile per image
    nT = H // TH

    # Fold BN (eval mode) into the conv: w' = w*scale, b' = beta - mean*scale.
    scale = gamma / jnp.sqrt(running_var + eps)                    # (C,)
    bias = beta - running_mean * scale                             # (C,)
    w = jnp.transpose(dw_weight[:, 0, :, :], (1, 2, 0)) * scale    # (3,3,C)
    # Tile along W so taps index directly into the flattened W*C lane axis,
    # then fold the conv's zero padding along W into the weights: the taps
    # whose lane roll would wrap around the W edge are zeroed here, so the
    # kernel needs no lane masks.
    wk = jnp.tile(w, (1, 1, W))                                    # (3,3,F)
    wk = wk.at[:, 0, (W - 1) * C:].set(0.0)   # dw=-1 tap that wraps into w=0
    wk = wk.at[:, 2, :C].set(0.0)             # dw=+1 tap that wraps into w=W-1
    w_flat = wk.reshape(9, F).astype(jnp.float32)                  # (9, F)
    b_tiled = jnp.tile(bias, W).reshape(1, F).astype(jnp.float32)  # (1, F)

    x_flat = x_nhwc.reshape(B, H, F)   # free reshape (merges contiguous dims)
    # TODO(synk): for stages where W*C % 128 != 0 but C % 128 == 0, flatten as
    # (B, H*W, C) instead (lane axis = C) so stores stay lane-dense and the
    # weights need no W-tiling.

    kernel = functools.partial(_residual_dwconvbn_kernel, H, C, TH)
    out = pl.pallas_call(
        kernel,
        out_shape=jax.ShapeDtypeStruct((B, H, F), x_nhwc.dtype),
        grid_spec=pltpu.PrefetchScalarGridSpec(
            num_scalar_prefetch=0,
            grid=(B, nT),
            in_specs=[
                pl.BlockSpec((1, H, F), lambda b, t: (b, 0, 0)),
                pl.BlockSpec((9, F), lambda b, t: (0, 0)),
                pl.BlockSpec((1, F), lambda b, t: (0, 0)),
            ],
            out_specs=pl.BlockSpec((1, TH, F), lambda b, t: (b, t, 0)),
        ),
        compiler_params=pltpu.CompilerParams(
            dimension_semantics=("parallel", "parallel"),
            vmem_limit_bytes=32 * 1024 * 1024),
    )(x_flat, w_flat, b_tiled)
    return out.reshape(B, H, W, C)


def residual_convbn(x_nchw, dw_weight, gamma, beta, running_mean, running_var,
                    eps=1e-5, block_h=None):
    """NCHW wrapper for PyTorch parity. In a real model keep the network in
    NHWC and call residual_convbn_nhwc directly so these layout transposes are
    hoisted/fused into adjacent ops instead of paid on every call."""
    x_nhwc = jnp.transpose(x_nchw, (0, 2, 3, 1))
    out = residual_convbn_nhwc(x_nhwc, dw_weight, gamma, beta, running_mean,
                               running_var, eps, block_h=block_h)
    return jnp.transpose(out, (0, 3, 1, 2))


def reference(x_nchw, dw_weight, gamma, beta, running_mean, running_var,
              eps=1e-5):
    """Pure-JAX reference: x + BN(depthwise_conv3x3(x)), NCHW."""
    C = x_nchw.shape[1]
    conv = jax.lax.conv_general_dilated(
        x_nchw, dw_weight, window_strides=(1, 1), padding=((1, 1), (1, 1)),
        dimension_numbers=("NCHW", "OIHW", "NCHW"), feature_group_count=C)
    scale = (gamma / jnp.sqrt(running_var + eps)).reshape(1, C, 1, 1)
    bias = (beta - running_mean * gamma / jnp.sqrt(running_var + eps)
            ).reshape(1, C, 1, 1)
    return x_nchw + conv * scale + bias


if __name__ == "__main__":
    B, C, H, W = 2, 8, 16, 16          # W*C = 128 -> lane-dense last dim
    key = jax.random.PRNGKey(0)
    k_x, k_w, k_m, k_v = jax.random.split(key, 4)

    x = jax.random.normal(k_x, (B, C, H, W), dtype=jnp.float32)
    # nn.Conv2d(C, C, 3, 1, 1, groups=C, bias=False) -> weight (C, 1, 3, 3)
    dw_weight = jax.random.normal(k_w, (C, 1, 3, 3), dtype=jnp.float32) * 0.1
    # BatchNorm2d params: weight init 1, bias init 0 (per ConvBN.__init__);
    # running stats drawn deterministically to make BN non-trivial.
    gamma = jnp.ones((C,), jnp.float32)
    beta = jnp.zeros((C,), jnp.float32)
    running_mean = jax.random.normal(k_m, (C,), dtype=jnp.float32) * 0.1
    running_var = jax.random.uniform(k_v, (C,), dtype=jnp.float32,
                                     minval=0.5, maxval=1.5)

    # block_h=8 -> grid (B, 2): exercises the H-tile halo fix-up path plus the
    # top/bottom zero-padding tiles and the folded W-boundary weights.
    out = residual_convbn(x, dw_weight, gamma, beta, running_mean, running_var,
                          block_h=8)
    out = jax.block_until_ready(out)

    ref = reference(x, dw_weight, gamma, beta, running_mean, running_var)
    assert out.shape == (B, C, H, W)
    assert jnp.max(jnp.abs(out - ref)) < 1e-4, "mismatch vs reference"
    # Explicit boundary-column / boundary-row checks (folded W padding, halo):
    assert jnp.max(jnp.abs(out[..., 0] - ref[..., 0])) < 1e-4
    assert jnp.max(jnp.abs(out[..., -1] - ref[..., -1])) < 1e-4
    assert jnp.max(jnp.abs(out[:, :, 0, :] - ref[:, :, 0, :])) < 1e-4
    assert jnp.max(jnp.abs(out[:, :, -1, :] - ref[:, :, -1, :])) < 1e-4

    print("KERNEL_OK")
</pallas_src>

<mosaic_0001>
module attributes {stable_mosaic.version = 11 : i64} {
  func.func @_residual_dwconvbn_kernel(%arg0: i32, %arg1: i32, %arg2: memref<1x16x128xf32, #tpu.memory_space<vmem>>, %arg3: memref<9x128xf32, #tpu.memory_space<vmem>>, %arg4: memref<1x128xf32, #tpu.memory_space<vmem>>, %arg5: memref<1x8x128xf32, #tpu.memory_space<vmem>>) attributes {dimension_semantics = [#tpu.dimension_semantics<parallel>, #tpu.dimension_semantics<parallel>], iteration_bounds = array<i64: 2, 2>, scalar_prefetch = 0 : i64, scratch_operands = 0 : i64, tpu.core_type = #tpu.core_type<tc>, window_params = [{transform_indices = @transform_0, window_bounds = array<i64: 1, 16, 128>}, {pipeline_mode = #tpu.pipeline_mode<synchronous>, transform_indices = @transform_1, window_bounds = array<i64: 9, 128>}, {pipeline_mode = #tpu.pipeline_mode<synchronous>, transform_indices = @transform_2, window_bounds = array<i64: 1, 128>}, {transform_indices = @transform_3, window_bounds = array<i64: 1, 8, 128>}]} {
    %c8_i32 = arith.constant 8 : i32
    %0 = arith.muli %arg1, %c8_i32 : i32
    %1 = tpu.assume_multiple %0, 8 : i32
    %c0 = arith.constant 0 : index
    %2 = arith.index_cast %1 : i32 to index
    %c0_0 = arith.constant 0 : index
    %3 = vector.load %arg2[%c0, %2, %c0_0] : memref<1x16x128xf32, #tpu.memory_space<vmem>>, vector<1x8x128xf32>
    %4 = vector.shape_cast %3 : vector<1x8x128xf32> to vector<8x128xf32>
    %c0_1 = arith.constant 0 : index
    %c0_2 = arith.constant 0 : index
    %5 = vector.load %arg3[%c0_1, %c0_2] : memref<9x128xf32, #tpu.memory_space<vmem>>, vector<9x128xf32>
    %c0_3 = arith.constant 0 : index
    %c0_4 = arith.constant 0 : index
    %6 = vector.load %arg4[%c0_3, %c0_4] : memref<1x128xf32, #tpu.memory_space<vmem>>, vector<1x128xf32>
    %7 = tpu.iota {dimensions = array<i32: 0>} : vector<8x1xi32>
    %c1_i32 = arith.constant 1 : i32
    %8 = vector.broadcast %c1_i32 : i32 to vector<8x1xi32>
    %9 = arith.cmpi sge, %7, %8 : vector<8x1xi32>
    %10 = arith.extui %9 : vector<8x1xi1> to vector<8x1xi32>
    %11 = arith.sitofp %10 : vector<8x1xi32> to vector<8x1xf32>
    %c7_i32 = arith.constant 7 : i32
    %12 = vector.broadcast %c7_i32 : i32 to vector<8x1xi32>
    %13 = arith.cmpi slt, %7, %12 : vector<8x1xi32>
    %14 = arith.extui %13 : vector<8x1xi1> to vector<8x1xi32>
    %15 = arith.sitofp %14 : vector<8x1xi32> to vector<8x1xf32>
    %c1_i32_5 = arith.constant 1 : i32
    %16 = tpu.dynamic_rotate %4 by %c1_i32_5 dim 0 : vector<8x128xf32>, i32 -> vector<8x128xf32>
    %17 = vector.broadcast %11 : vector<8x1xf32> to vector<8x128xf32>
    %18 = arith.mulf %16, %17 : vector<8x128xf32>
    %c7_i32_6 = arith.constant 7 : i32
    %19 = tpu.dynamic_rotate %4 by %c7_i32_6 dim 0 : vector<8x128xf32>, i32 -> vector<8x128xf32>
    %20 = vector.broadcast %15 : vector<8x1xf32> to vector<8x128xf32>
    %21 = arith.mulf %19, %20 : vector<8x128xf32>
    %22 = vector.extract_strided_slice %5 {offsets = [0, 0], sizes = [1, 128], strides = [1, 1]} : vector<9x128xf32> to vector<1x128xf32>
    %23 = vector.shape_cast %22 : vector<1x128xf32> to vector<128xf32>
    %24 = vector.shape_cast %23 : vector<128xf32> to vector<1x128xf32>
    %25 = vector.broadcast %24 : vector<1x128xf32> to vector<8x128xf32>
    %26 = arith.mulf %18, %25 : vector<8x128xf32>
    %27 = vector.extract_strided_slice %5 {offsets = [3, 0], sizes = [1, 128], strides = [1, 1]} : vector<9x128xf32> to vector<1x128xf32>
    %28 = vector.shape_cast %27 : vector<1x128xf32> to vector<128xf32>
    %29 = vector.shape_cast %28 : vector<128xf32> to vector<1x128xf32>
    %30 = vector.broadcast %29 : vector<1x128xf32> to vector<8x128xf32>
    %31 = arith.mulf %4, %30 : vector<8x128xf32>
    %32 = arith.addf %26, %31 : vector<8x128xf32>
    %33 = vector.extract_strided_slice %5 {offsets = [6, 0], sizes = [1, 128], strides = [1, 1]} : vector<9x128xf32> to vector<1x128xf32>
    %34 = vector.shape_cast %33 : vector<1x128xf32> to vector<128xf32>
    %35 = vector.shape_cast %34 : vector<128xf32> to vector<1x128xf32>
    %36 = vector.broadcast %35 : vector<1x128xf32> to vector<8x128xf32>
    %37 = arith.mulf %21, %36 : vector<8x128xf32>
    %38 = arith.addf %32, %37 : vector<8x128xf32>
    %39 = vector.extract_strided_slice %5 {offsets = [1, 0], sizes = [1, 128], strides = [1, 1]} : vector<9x128xf32> to vector<1x128xf32>
    %40 = vector.shape_cast %39 : vector<1x128xf32> to vector<128xf32>
    %41 = vector.shape_cast %40 : vector<128xf32> to vector<1x128xf32>
    %42 = vector.broadcast %41 : vector<1x128xf32> to vector<8x128xf32>
    %43 = arith.mulf %18, %42 : vector<8x128xf32>
    %44 = vector.extract_strided_slice %5 {offsets = [4, 0], sizes = [1, 128], strides = [1, 1]} : vector<9x128xf32> to vector<1x128xf32>
    %45 = vector.shape_cast %44 : vector<1x128xf32> to vector<128xf32>
    %46 = vector.shape_cast %45 : vector<128xf32> to vector<1x128xf32>
    %47 = vector.broadcast %46 : vector<1x128xf32> to vector<8x128xf32>
    %48 = arith.mulf %4, %47 : vector<8x128xf32>
    %49 = arith.addf %43, %48 : vector<8x128xf32>
    %50 = vector.extract_strided_slice %5 {offsets = [7, 0], sizes = [1, 128], strides = [1, 1]} : vector<9x128xf32> to vector<1x128xf32>
    %51 = vector.shape_cast %50 : vector<1x128xf32> to vector<128xf32>
    %52 = vector.shape_cast %51 : vector<128xf32> to vector<1x128xf32>
    %53 = vector.broadcast %52 : vector<1x128xf32> to vector<8x128xf32>
    %54 = arith.mulf %21, %53 : vector<8x128xf32>
    %55 = arith.addf %49, %54 : vector<8x128xf32>
    %56 = vector.extract_strided_slice %5 {offsets = [2, 0], sizes = [1, 128], strides = [1, 1]} : vector<9x128xf32> to vector<1x128xf32>
    %57 = vector.shape_cast %56 : vector<1x128xf32> to vector<128xf32>
    %58 = vector.shape_cast %57 : vector<128xf32> to vector<1x128xf32>
    %59 = vector.broadcast %58 : vector<1x128xf32> to vector<8x128xf32>
    %60 = arith.mulf %18, %59 : vector<8x128xf32>
    %61 = vector.extract_strided_slice %5 {offsets = [5, 0], sizes = [1, 128], strides = [1, 1]} : vector<9x128xf32> to vector<1x128xf32>
    %62 = vector.shape_cast %61 : vector<1x128xf32> to vector<128xf32>
    %63 = vector.shape_cast %62 : vector<128xf32> to vector<1x128xf32>
    %64 = vector.broadcast %63 : vector<1x128xf32> to vector<8x128xf32>
    %65 = arith.mulf %4, %64 : vector<8x128xf32>
    %66 = arith.addf %60, %65 : vector<8x128xf32>
    %67 = vector.extract_strided_slice %5 {offsets = [8, 0], sizes = [1, 128], strides = [1, 1]} : vector<9x128xf32> to vector<1x128xf32>
    %68 = vector.shape_cast %67 : vector<1x128xf32> to vector<128xf32>
    %69 = vector.shape_cast %68 : vector<128xf32> to vector<1x128xf32>
    %70 = vector.broadcast %69 : vector<1x128xf32> to vector<8x128xf32>
    %71 = arith.mulf %21, %70 : vector<8x128xf32>
    %72 = arith.addf %66, %71 : vector<8x128xf32>
    %c8_i32_7 = arith.constant 8 : i32
    %73 = tpu.dynamic_rotate %38 by %c8_i32_7 dim 1 : vector<8x128xf32>, i32 -> vector<8x128xf32>
    %c120_i32 = arith.constant 120 : i32
    %74 = tpu.dynamic_rotate %72 by %c120_i32 dim 1 : vector<8x128xf32>, i32 -> vector<8x128xf32>
    %75 = arith.addf %4, %55 : vector<8x128xf32>
    %76 = arith.addf %75, %73 : vector<8x128xf32>
    %77 = arith.addf %76, %74 : vector<8x128xf32>
    %78 = vector.broadcast %6 : vector<1x128xf32> to vector<8x128xf32>
    %79 = arith.addf %77, %78 : vector<8x128xf32>
    %c0_8 = arith.constant 0 : index
    %c0_9 = arith.constant 0 : index
    %c0_10 = arith.constant 0 : index
    %80 = vector.load %arg5[%c0_8, %c0_9, %c0_10] : memref<1x8x128xf32, #tpu.memory_space<vmem>>, vector<1x8x128xf32>
    %81 = vector.shape_cast %80 : vector<1x8x128xf32> to vector<8x128xf32>
    %82 = vector.shape_cast %79 : vector<8x128xf32> to vector<1x8x128xf32>
    tpu.vector_store %arg5[%c0_8, %c0_9, %c0_10], %82 {strides = array<i32>} : memref<1x8x128xf32, #tpu.memory_space<vmem>>, vector<1x8x128xf32>,
    %c8_i32_11 = arith.constant 8 : i32
    %83 = arith.subi %1, %c8_i32_11 : i32
    %c0_i32 = arith.constant 0 : i32
    %84 = arith.maxsi %83, %c0_i32 : i32
    %85 = tpu.assume_multiple %84, 8 : i32
    %c8_i32_12 = arith.constant 8 : i32
    %86 = arith.addi %1, %c8_i32_12 : i32
    %c8_i32_13 = arith.constant 8 : i32
    %87 = arith.minsi %86, %c8_i32_13 : i32
    %88 = tpu.assume_multiple %87, 8 : i32
    %c0_14 = arith.constant 0 : index
    %89 = arith.index_cast %85 : i32 to index
    %c0_15 = arith.constant 0 : index
    %90 = vector.load %arg2[%c0_14, %89, %c0_15] : memref<1x16x128xf32, #tpu.memory_space<vmem>>, vector<1x8x128xf32>
    %91 = vector.shape_cast %90 : vector<1x8x128xf32> to vector<8x128xf32>
    %92 = vector.extract_strided_slice %91 {offsets = [7, 0], sizes = [1, 128], strides = [1, 1]} : vector<8x128xf32> to vector<1x128xf32>
    %c0_16 = arith.constant 0 : index
    %93 = arith.index_cast %88 : i32 to index
    %c0_17 = arith.constant 0 : index
    %94 = vector.load %arg2[%c0_16, %93, %c0_17] : memref<1x16x128xf32, #tpu.memory_space<vmem>>, vector<1x8x128xf32>
    %95 = vector.shape_cast %94 : vector<1x8x128xf32> to vector<8x128xf32>
    %96 = vector.extract_strided_slice %95 {offsets = [0, 0], sizes = [1, 128], strides = [1, 1]} : vector<8x128xf32> to vector<1x128xf32>
    %c0_i32_18 = arith.constant 0 : i32
    %97 = arith.cmpi sgt, %arg1, %c0_i32_18 : i32
    %98 = arith.extui %97 : i1 to i32
    %99 = arith.sitofp %98 : i32 to f32
    %100 = vector.broadcast %99 : f32 to vector<1x128xf32>
    %101 = arith.mulf %92, %100 : vector<1x128xf32>
    %c1_i32_19 = arith.constant 1 : i32
    %102 = arith.cmpi slt, %arg1, %c1_i32_19 : i32
    %103 = arith.extui %102 : i1 to i32
    %104 = arith.sitofp %103 : i32 to f32
    %105 = vector.broadcast %104 : f32 to vector<1x128xf32>
    %106 = arith.mulf %96, %105 : vector<1x128xf32>
    %107 = vector.extract_strided_slice %5 {offsets = [0, 0], sizes = [1, 128], strides = [1, 1]} : vector<9x128xf32> to vector<1x128xf32>
    %108 = vector.shape_cast %107 : vector<1x128xf32> to vector<128xf32>
    %109 = vector.shape_cast %108 : vector<128xf32> to vector<1x128xf32>
    %110 = arith.mulf %101, %109 : vector<1x128xf32>
    %c8_i32_20 = arith.constant 8 : i32
    %111 = tpu.dynamic_rotate %110 by %c8_i32_20 dim 1 : vector<1x128xf32>, i32 -> vector<1x128xf32>
    %112 = vector.extract_strided_slice %5 {offsets = [1, 0], sizes = [1, 128], strides = [1, 1]} : vector<9x128xf32> to vector<1x128xf32>
    %113 = vector.shape_cast %112 : vector<1x128xf32> to vector<128xf32>
    %114 = vector.shape_cast %113 : vector<128xf32> to vector<1x128xf32>
    %115 = arith.mulf %101, %114 : vector<1x128xf32>
    %116 = arith.addf %111, %115 : vector<1x128xf32>
    %117 = vector.extract_strided_slice %5 {offsets = [2, 0], sizes = [1, 128], strides = [1, 1]} : vector<9x128xf32> to vector<1x128xf32>
    %118 = vector.shape_cast %117 : vector<1x128xf32> to vector<128xf32>
    %119 = vector.shape_cast %118 : vector<128xf32> to vector<1x128xf32>
    %120 = arith.mulf %101, %119 : vector<1x128xf32>
    %c120_i32_21 = arith.constant 120 : i32
    %121 = tpu.dynamic_rotate %120 by %c120_i32_21 dim 1 : vector<1x128xf32>, i32 -> vector<1x128xf32>
    %122 = arith.addf %116, %121 : vector<1x128xf32>
    %123 = vector.extract_strided_slice %5 {offsets = [6, 0], sizes = [1, 128], strides = [1, 1]} : vector<9x128xf32> to vector<1x128xf32>
    %124 = vector.shape_cast %123 : vector<1x128xf32> to vector<128xf32>
    %125 = vector.shape_cast %124 : vector<128xf32> to vector<1x128xf32>
    %126 = arith.mulf %106, %125 : vector<1x128xf32>
    %c8_i32_22 = arith.constant 8 : i32
    %127 = tpu.dynamic_rotate %126 by %c8_i32_22 dim 1 : vector<1x128xf32>, i32 -> vector<1x128xf32>
    %128 = vector.extract_strided_slice %5 {offsets = [7, 0], sizes = [1, 128], strides = [1, 1]} : vector<9x128xf32> to vector<1x128xf32>
    %129 = vector.shape_cast %128 : vector<1x128xf32> to vector<128xf32>
    %130 = vector.shape_cast %129 : vector<128xf32> to vector<1x128xf32>
    %131 = arith.mulf %106, %130 : vector<1x128xf32>
    %132 = arith.addf %127, %131 : vector<1x128xf32>
    %133 = vector.extract_strided_slice %5 {offsets = [8, 0], sizes = [1, 128], strides = [1, 1]} : vector<9x128xf32> to vector<1x128xf32>
    %134 = vector.shape_cast %133 : vector<1x128xf32> to vector<128xf32>
    %135 = vector.shape_cast %134 : vector<128xf32> to vector<1x128xf32>
    %136 = arith.mulf %106, %135 : vector<1x128xf32>
    %c120_i32_23 = arith.constant 120 : i32
    %137 = tpu.dynamic_rotate %136 by %c120_i32_23 dim 1 : vector<1x128xf32>, i32 -> vector<1x128xf32>
    %138 = arith.addf %132, %137 : vector<1x128xf32>
    %139 = vector.extract_strided_slice %79 {offsets = [0, 0], sizes = [1, 128], strides = [1, 1]} : vector<8x128xf32> to vector<1x128xf32>
    %140 = arith.addf %139, %122 : vector<1x128xf32>
    %c0_24 = arith.constant 0 : index
    %c0_25 = arith.constant 0 : index
    %c0_26 = arith.constant 0 : index
    %141 = vector.load %arg5[%c0_24, %c0_25, %c0_26] : memref<1x8x128xf32, #tpu.memory_space<vmem>>, vector<1x1x128xf32>
    %142 = vector.shape_cast %141 : vector<1x1x128xf32> to vector<1x128xf32>
    %143 = vector.shape_cast %140 : vector<1x128xf32> to vector<1x1x128xf32>
    tpu.vector_store %arg5[%c0_24, %c0_25, %c0_26], %143 {strides = array<i32>} : memref<1x8x128xf32, #tpu.memory_space<vmem>>, vector<1x1x128xf32>,
    %144 = vector.extract_strided_slice %79 {offsets = [7, 0], sizes = [1, 128], strides = [1, 1]} : vector<8x128xf32> to vector<1x128xf32>
    %145 = arith.addf %144, %138 : vector<1x128xf32>
    %c0_27 = arith.constant 0 : index
    %c7 = arith.constant 7 : index
    %c0_28 = arith.constant 0 : index
    %146 = vector.load %arg5[%c0_27, %c7, %c0_28] : memref<1x8x128xf32, #tpu.memory_space<vmem>>, vector<1x1x128xf32>
    %147 = vector.shape_cast %146 : vector<1x1x128xf32> to vector<1x128xf32>
    %148 = vector.shape_cast %145 : vector<1x128xf32> to vector<1x1x128xf32>
    tpu.vector_store %arg5[%c0_27, %c7, %c0_28], %148 {strides = array<i32>} : memref<1x8x128xf32, #tpu.memory_space<vmem>>, vector<1x1x128xf32>,
    return
  }
  func.func @transform_0(%arg0: i32, %arg1: i32) -> (i32, i32, i32) {
    %c0_i32 = arith.constant 0 : i32
    %c0_i32_0 = arith.constant 0 : i32
    %c0_i32_1 = arith.constant 0 : i32
    return %arg0, %c0_i32, %c0_i32_0 : i32, i32, i32
  }
  func.func @transform_1(%arg0: i32, %arg1: i32) -> (i32, i32) {
    %c0_i32 = arith.constant 0 : i32
    %c0_i32_0 = arith.constant 0 : i32
    %c0_i32_1 = arith.constant 0 : i32
    return %c0_i32, %c0_i32_0 : i32, i32
  }
  func.func @transform_2(%arg0: i32, %arg1: i32) -> (i32, i32) {
    %c0_i32 = arith.constant 0 : i32
    %c0_i32_0 = arith.constant 0 : i32
    %c0_i32_1 = arith.constant 0 : i32
    return %c0_i32, %c0_i32_0 : i32, i32
  }
  func.func @transform_3(%arg0: i32, %arg1: i32) -> (i32, i32, i32) {
    %c0_i32 = arith.constant 0 : i32
    %c0_i32_0 = arith.constant 0 : i32
    return %arg0, %arg1, %c0_i32 : i32, i32, i32
  }
}

</mosaic_0001>

<llo_original>
// kernel: tpu_custom_call.1
$region0: #{tpu_custom_call.1}
  #allocation0 [shape = 'u32[]', space=smem, size = 0x4, offset = 0x4, fixed_abs, tag = 'smem constant byte address 0x4 - core index']
  #allocation1 [shape = 'u32[144,128]{1,0:T(1,128)}', space=vmem, size = 0x12000, scoped, tag = 'internal scratch']
  %s0 = inlined_call_operand.hbm [shape: f32[2,16,128], index: 0, kind: input, shape index: {}]
  %s1 = inlined_call_operand.hbm [shape: f32[9,128], index: 1, kind: input, shape index: {}]
  %s2 = inlined_call_operand.vmem [shape: f32[1,128], index: 2, kind: input, shape index: {}]
  %s3 = inlined_call_operand.hbm [shape: f32[2,16,128], index: 3, kind: output, shape index: {}]
  %s4 = sld [smem:[#allocation0]]
  $region53: #{tpu_custom_call.1} parent=0
    _
  %s6 = ssub.s32 1, %s4
  %s7 = scalar_select 0, %s6, %s4
  $region1: #{tpu_custom_call.1} parent=0
    #allocation2 [shape = 'u8[16384]{0}', space=vmem, size = 0x4000, scoped, tag = 'input window, operand 0']
    #allocation3 [shape = 's32[2]{0}', space=sflag, size = 0x8, scoped, tag = 'scoped memory for tpu_custom_call.1']
    #allocation4 [shape = 's32[2]{0}', space=sflag, size = 0x8, scoped, tag = 'scoped memory for tpu_custom_call.1']
    #allocation5 [shape = 'u8[8192]{0}', space=vmem, size = 0x2000, scoped, tag = 'input window, operand 1, single buffered']
    #allocation6 [shape = 's32[1]{0}', space=sflag, size = 0x4, scoped, tag = 'scoped memory for tpu_custom_call.1']
    #allocation7 [shape = 'u8[8192]{0}', space=vmem, size = 0x2000, scoped, tag = 'output window, operand 0']
    %8 = vsyncpa [#allocation3], 0
    %s9 = scalar_lea.sflag [#allocation3], 1
    %10 = vsyncpa %s9, 0
    %11 = vsyncpa [#allocation6], 0
    %12 = vsyncpa [#allocation4], 0
    %s13 = scalar_lea.sflag [#allocation4], 1
    %14 = vsyncpa %s13, 0
    loop: start=0, step=1, limit=6
    $region2: #{tpu_custom_call.1} parent=1 // loop_pre_header
      _
    $region3: #{tpu_custom_call.1} parent=1 // loop_header
      %s16 = sphi 0, %s20
      %p17 = scmp.ge.s32.totalorder %s16, 6
      %s23 = sphi 0, %s35
      %s24 = sphi 0, %s31
      %s25 = sphi 0, %s23
      %s26 = sphi 0, %s24
      %s27 = sphi 0, %s25
      %s28 = sphi 0, %s26
      %s38 = sphi 0, %s40
      %s41 = sphi 0, %s38
      %s42 = sphi 0, %s41
      %s58 = sphi 0, %s42
      %s62 = sphi 0, %s62
      %s64 = sphi 0, %s62
      %s65 = sphi 0, %s64
      %s79 = sphi 0, %s65
      %s83 = sphi 0, %s83
      %s85 = sphi 0, %s83
      %s86 = sphi 0, %s85
      %s100 = sphi 0, %s86
      %s108 = sphi 0, %s110
      %s111 = sphi 0, %s108
      %s112 = sphi 0, %s111
      %s128 = sphi 0, %s112
    $region4: #{tpu_custom_call.1} parent=1 // loop_header_branch
      %19 = sbr.rel (%p17) target = $region8
    $region5: #{tpu_custom_call.1} parent=1 // loop_body
      %s21 = ssub.s32 %s16, 1
      %s22 = ssub.s32 %s16, 2
      %s29 = sadd.s32 1, %s24
      %p30 = scmp.ge.s32.totalorder %s29, 2
      %s31 = scalar_select %p30, 0, %s29
      %s32 = sadd.s32 1, %s23
      %s33 = scalar_select %p30, %s32, %s23
      %p34 = scmp.ge.s32.totalorder %s33, 2
      %s35 = scalar_select %p34, 0, %s33
      %s36 = ssub.s32 %s23, %s35
      %p37 = scmp.eq.s32.totalorder %s36, 0
      %s39 = sadd.s32 %s38, 1
      %s40 = scalar_select %p37, %s38, %s39
      %p43 = pneg %p37
      %p44 = scmp.eq.s32.totalorder %s16, 3
      %p45 = por %p43, %p44
      %p46 = scmp.ne.s32.totalorder %s38, %s41
      %p47 = scmp.eq.s32.totalorder %s16, 0
      %p48 = por %p46, %p47
      %p49 = scmp.ne.s32.totalorder %s38, %s41
      %p50 = scmp.eq.s32.totalorder %s21, 3
      %p51 = por %p49, %p50
      %p52 = scmp.ne.s32.totalorder %s41, %s42
      %p53 = scmp.eq.s32.totalorder %s21, 0
      %p54 = por %p52, %p53
      %p55 = scmp.ne.s32.totalorder %s41, %s42
      %p56 = scmp.eq.s32.totalorder %s22, 3
      %p57 = por %p55, %p56
      %p59 = scmp.ne.s32.totalorder %s42, %s58
      %p60 = scmp.eq.s32.totalorder %s22, 0
      %p61 = por %p59, %p60
      %s63 = sadd.s32 %s62, 1
      %p66 = scmp.eq.s32.totalorder %s16, 3
      %p67 = scmp.ne.s32.totalorder %s62, %s64
      %p68 = scmp.eq.s32.totalorder %s16, 0
      %p69 = por %p67, %p68
      %p70 = scmp.ne.s32.totalorder %s62, %s64
      %p71 = scmp.eq.s32.totalorder %s21, 3
      %p72 = por %p70, %p71
      %p73 = scmp.ne.s32.totalorder %s64, %s65
      %p74 = scmp.eq.s32.totalorder %s21, 0
      %p75 = por %p73, %p74
      %p76 = scmp.ne.s32.totalorder %s64, %s65
      %p77 = scmp.eq.s32.totalorder %s22, 3
      %p78 = por %p76, %p77
      %p80 = scmp.ne.s32.totalorder %s65, %s79
      %p81 = scmp.eq.s32.totalorder %s22, 0
      %p82 = por %p80, %p81
      %s84 = sadd.s32 %s83, 1
      %p87 = scmp.eq.s32.totalorder %s16, 3
      %p88 = scmp.ne.s32.totalorder %s83, %s85
      %p89 = scmp.eq.s32.totalorder %s16, 0
      %p90 = por %p88, %p89
      %p91 = scmp.ne.s32.totalorder %s83, %s85
      %p92 = scmp.eq.s32.totalorder %s21, 3
      %p93 = por %p91, %p92
      %p94 = scmp.ne.s32.totalorder %s85, %s86
      %p95 = scmp.eq.s32.totalorder %s21, 0
      %p96 = por %p94, %p95
      %p97 = scmp.ne.s32.totalorder %s85, %s86
      %p98 = scmp.eq.s32.totalorder %s22, 3
      %p99 = por %p97, %p98
      %p101 = scmp.ne.s32.totalorder %s86, %s100
      %p102 = scmp.eq.s32.totalorder %s22, 0
      %p103 = por %p101, %p102
      %s104 = ssub.s32 %s23, %s35
      %s105 = ssub.s32 %s24, %s31
      %s106 = sor.u32 %s104, %s105
      %p107 = scmp.eq.s32.totalorder %s106, 0
      %s109 = sadd.s32 %s108, 1
      %s110 = scalar_select %p107, %s108, %s109
      %p113 = pneg %p107
      %p114 = scmp.eq.s32.totalorder %s16, 3
      %p115 = por %p113, %p114
      %p116 = scmp.ne.s32.totalorder %s108, %s111
      %p117 = scmp.eq.s32.totalorder %s16, 0
      %p118 = por %p116, %p117
      %p119 = scmp.ne.s32.totalorder %s108, %s111
      %p120 = scmp.eq.s32.totalorder %s21, 3
      %p121 = por %p119, %p120
      %p122 = scmp.ne.s32.totalorder %s111, %s112
      %p123 = scmp.eq.s32.totalorder %s21, 0
      %p124 = por %p122, %p123
      %p125 = scmp.ne.s32.totalorder %s111, %s112
      %p126 = scmp.eq.s32.totalorder %s22, 3
      %p127 = por %p125, %p126
      %p129 = scmp.ne.s32.totalorder %s112, %s128
      %p130 = scmp.eq.s32.totalorder %s22, 0
      %p131 = por %p129, %p130
      %p132 = scmp.le.s32.totalorder 1, %s16
      %p133 = scmp.lt.s32.totalorder %s16, 5
      %p134 = pnand %p132, %p133
      %p135 = pneg %p134
      // Predicated region
      $region9: #{tpu_custom_call.1} parent=5 // pred_check
        _
      $region10: #{tpu_custom_call.1} parent=5 // pred_check_branch
        %137 = sbr.rel (%p134) target = $region12
      $region11: #{tpu_custom_call.1} parent=5 // pred_region
        %s138 = ssub.s32 %s16, 1
        // Predicated region
        $region13: #{tpu_custom_call.1} parent=11 // pred_check
          %p139 = pneg %p75
        $region14: #{tpu_custom_call.1} parent=11 // pred_check_branch
          %141 = sbr.rel (%p139) target = $region16
        $region15: #{tpu_custom_call.1} parent=11 // pred_region
          %s143 = ssub.s32 256, 256
          %144 = vsyncadd [#allocation6], %s143
          %s145 = sshll.u32 [#allocation5], 4
          %s146 = int_to_ptr.vmem [resolvable:$true] %s145
          %151 = dma.hbm_to_vmem [thread:$0]  %s1, 256, %s146, [#allocation6], 128, 128, 8
        $region16: #{tpu_custom_call.1} parent=11 // pred_fallthru
          _
        // Predicated region
        $region17: #{tpu_custom_call.1} parent=11 // pred_check
          %p152 = pneg %p96
        $region18: #{tpu_custom_call.1} parent=11 // pred_check_branch
          %154 = sbr.rel (%p152) target = $region20
        $region19: #{tpu_custom_call.1} parent=11 // pred_region
          _
        $region20: #{tpu_custom_call.1} parent=11 // pred_fallthru
          _
      $region12: #{tpu_custom_call.1} parent=5 // pred_fallthru
        _
      %p155 = scmp.lt.s32.totalorder %s16, 4
      // Predicated region
      $region21: #{tpu_custom_call.1} parent=5 // pred_check
        %p156 = pneg %p155
      $region22: #{tpu_custom_call.1} parent=5 // pred_check_branch
        %158 = sbr.rel (%p156) target = $region24
      $region23: #{tpu_custom_call.1} parent=5 // pred_region
        // Predicated region
        $region25: #{tpu_custom_call.1} parent=23 // pred_check
          %p159 = pneg %p48
        $region26: #{tpu_custom_call.1} parent=23 // pred_check_branch
          %161 = sbr.rel (%p159) target = $region28
        $region27: #{tpu_custom_call.1} parent=23 // pred_region
          %s162 = sand.u32 %s38, 1
          %s163 = scalar_lea.sflag [#allocation3], %s162
          %s164 = sand.u32 %s38, 1
          %s165 = smul.addr %s164, 16
          %s166 = scalar_lea.vmem [#allocation2], %s165
          %s168 = ssub.s32 256, 256
          %169 = vsyncadd %s163, %s168
          %s170 = smul.addr %s23, 2
          %s171 = smul.addr %s170, 128
          %s172 = scalar_lea.hbm %s0, %s171
          %s173 = sshll.u32 %s166, 4
          %s174 = int_to_ptr.vmem [resolvable:$true] %s173
          %179 = dma.hbm_to_vmem [thread:$0]  %s172, 256, %s174, %s163, 128, 128, 8
        $region28: #{tpu_custom_call.1} parent=23 // pred_fallthru
          _
      $region24: #{tpu_custom_call.1} parent=5 // pred_fallthru
        _
      %p180 = scmp.le.s32.totalorder 1, %s16
      %p181 = scmp.lt.s32.totalorder %s16, 5
      %p182 = pnand %p180, %p181
      %p183 = pneg %p182
      // Predicated region
      $region29: #{tpu_custom_call.1} parent=5 // pred_check
        _
      $region30: #{tpu_custom_call.1} parent=5 // pred_check_branch
        %185 = sbr.rel (%p182) target = $region32
      $region31: #{tpu_custom_call.1} parent=5 // pred_region
        %s186 = ssub.s32 %s16, 1
        %s187 = sand.u32 %s41, 1
        %s188 = scalar_lea.sflag [#allocation3], %s187
        %s189 = sand.u32 %s41, 1
        %s190 = smul.addr %s189, 16
        %s191 = scalar_lea.vmem [#allocation2], %s190
        // Predicated region
        $region33: #{tpu_custom_call.1} parent=31 // pred_check
          %p192 = pneg %p54
        $region34: #{tpu_custom_call.1} parent=31 // pred_check_branch
          %194 = sbr.rel (%p192) target = $region36
        $region35: #{tpu_custom_call.1} parent=31 // pred_region
          %195 = dma.done %s188, 256
        $region36: #{tpu_custom_call.1} parent=31 // pred_fallthru
          _
        // Predicated region
        $region37: #{tpu_custom_call.1} parent=31 // pred_check
          %p196 = pneg %p75
        $region38: #{tpu_custom_call.1} parent=31 // pred_check_branch
          %198 = sbr.rel (%p196) target = $region40
        $region39: #{tpu_custom_call.1} parent=31 // pred_region
          %199 = dma.done [#allocation6], 256
        $region40: #{tpu_custom_call.1} parent=31 // pred_fallthru
          _
        %s200 = sand.u32 %s41, 1
        %s201 = scalar_lea.sflag [#allocation3], %s200
        %s202 = sand.u32 %s41, 1
        %s203 = smul.addr %s202, 16
        %s204 = scalar_lea.vmem [#allocation2], %s203
        %p205 = pneg %p54
        %p206 = pneg %p51
        %p207 = pneg %p75
        %p208 = pneg %p72
        %p209 = pneg %p96
        %p210 = pneg %p93
        %p211 = pneg %p124
        %p212 = pneg %p121
        %s213 = sand.u32 %s111, 1
        %s214 = scalar_lea.sflag [#allocation4], %s213
        %s215 = sand.u32 %s111, 1
        %s216 = smul.addr %s215, 8
        %s217 = scalar_lea.vmem [#allocation7], %s216
        %s218 = smul.u32 %s26, 8
        %s219 = scalar_lea.vmem %s191, %s218 [#allocation2]
        %v220 = vld [vmem:[%s219] sm:$0xff]
        %v221 = vld [vmem:[#allocation5] sm:$0xff]
        %v222 = vld [vmem:[#allocation5 + $0x8] sm:$0x1]
        %v223 = vld [vmem:[%s2] sm:$0x1]
        %v224 = vlaneseq
        %v225 = vshrl.u32 %v224, 7
        %vm226 = vcmp.ge.s32.totalorder %v225, 1
        %v227 = vsel %vm226, 1, 0
        %v228 = vcvt.s32.f32 %v227
        %vm229 = vcmp.lt.s32.totalorder %v225, 7
        %v230 = vsel %vm229, 1, 0
        %v231 = vcvt.s32.f32 %v230
        %v232 = vrot.slane %v220, 7
        %v233 = vmul.f32 %v232, %v228
        %v234 = vrot.slane %v220, 1
        %v235 = vmul.f32 %v234, %v231
        %v236 = vlaneseq
        %v237 = vshrl.u32 %v236, 7
        %v238 = vsub.s32 0, %v237
        %v239 = vrot.slane %v221, %v238
        %v240 = vmul.f32 %v233, %v239
        %v241 = vlaneseq
        %v242 = vshrl.u32 %v241, 7
        %v243 = vsub.s32 3, %v242
        %v244 = vrot.slane %v221, %v243
        %v245 = vmul.f32 %v220, %v244
        %v246 = vadd.f32 %v240, %v245
        %v247 = vlaneseq
        %v248 = vshrl.u32 %v247, 7
        %v249 = vsub.s32 6, %v248
        %v250 = vrot.slane %v221, %v249
        %v251 = vmul.f32 %v235, %v250
        %v252 = vadd.f32 %v246, %v251
        %v253 = vlaneseq
        %v254 = vshrl.u32 %v253, 7
        %v255 = vsub.s32 1, %v254
        %v256 = vrot.slane %v221, %v255
        %v257 = vmul.f32 %v233, %v256
        %v258 = vlaneseq
        %v259 = vshrl.u32 %v258, 7
        %v260 = vsub.s32 4, %v259
        %v261 = vrot.slane %v221, %v260
        %v262 = vmul.f32 %v220, %v261
        %v263 = vadd.f32 %v257, %v262
        %v264 = vlaneseq
        %v265 = vshrl.u32 %v264, 7
        %v266 = vsub.s32 7, %v265
        %v267 = vrot.slane %v221, %v266
        %v268 = vmul.f32 %v235, %v267
        %v269 = vadd.f32 %v263, %v268
        %v270 = vlaneseq
        %v271 = vshrl.u32 %v270, 7
        %v272 = vsub.s32 2, %v271
        %v273 = vrot.slane %v221, %v272
        %v274 = vmul.f32 %v233, %v273
        %v275 = vlaneseq
        %v276 = vshrl.u32 %v275, 7
        %v277 = vsub.s32 5, %v276
        %v278 = vrot.slane %v221, %v277
        %v279 = vmul.f32 %v220, %v278
        %v280 = vadd.f32 %v274, %v279
        %v281 = vlaneseq
        %v282 = vshrl.u32 %v281, 7
        %v283 = vsub.s32 0, %v282
        %v284 = vrot.slane %v222, %v283
        %v285 = vmul.f32 %v235, %v284
        %v286 = vadd.f32 %v280, %v285
        %287 = vrot.lane.b32.xlu0 %v252, 8
        %v288 = vpop.permute.xlu0 %287
        %289 = vrot.lane.b32.xlu0 %v286, 120
        %v290 = vpop.permute.xlu0 %289
        %v291 = vadd.f32 %v220, %v269
        %v292 = vadd.f32 %v291, %v288
        %v293 = vadd.f32 %v292, %v290
        %v295 = vlaneseq
        %v296 = vshrl.u32 %v295, 7
        %v297 = vsub.s32 0, %v296
        %v298 = vrot.slane %v223, %v297
        %v300 = vadd.f32 %v293, %v298
        %301 = vst [vmem:[%s217] sm:$0xff] %v300
        %s302 = ssub.s32 %s218, 8
        %p303 = scmp.gt.s32.totalorder %s302, 0
        %s304 = scalar_select %p303, %s302, 0
        %s305 = sadd.s32 %s218, 8
        %p306 = scmp.lt.s32.totalorder %s305, 8
        %s307 = scalar_select %p306, %s305, 8
        %s308 = scalar_lea.vmem %s191, %s304 [#allocation2]
        %v309 = vld [vmem:[%s308] sm:$0xff]
        %s310 = scalar_lea.vmem %s191, %s307 [#allocation2]
        %v311 = vld [vmem:[%s310] sm:$0xff]
        %p312 = scmp.gt.s32.totalorder %s26, 0
        %s313 = scalar_select %p312, 1, 0
        %s314 = scvt.s32.f32 %s313
        %v315 = vstv %s314
        %v316 = vmul.f32 %v309, %v315
        %p317 = scmp.lt.s32.totalorder %s26, 1
        %s318 = scalar_select %p317, 1, 0
        %s319 = scvt.s32.f32 %s318
        %v320 = vstv %s319
        %v321 = vmul.f32 %v311, %v320
        %v323 = vrot.slane %v221, 1
        %v325 = vmul.f32 %v316, %v323
        %v327 = vrot.slane %v325, 7
        %329 = vrot.lane.b32.xlu0 %v327, 8
        %v330 = vpop.permute.xlu0 %329
        %v331 = vrot.slane %v221, 2
        %v333 = vmul.f32 %v316, %v331
        %v335 = vrot.slane %v333, 7
        %v337 = vadd.f32 %v330, %v335
        %v338 = vrot.slane %v221, 3
        %v340 = vmul.f32 %v316, %v338
        %v342 = vrot.slane %v340, 7
        %344 = vrot.lane.b32.xlu0 %v342, 120
        %v345 = vpop.permute.xlu0 %344
        %v346 = vadd.f32 %v337, %v345
        %v347 = vrot.slane %v221, 6
        %v349 = vmul.f32 %v321, %v347
        %350 = vrot.lane.b32.xlu0 %v349, 8
        %v351 = vpop.permute.xlu0 %350
        %v352 = vrot.slane %v221, 7
        %v354 = vmul.f32 %v321, %v352
        %v355 = vadd.f32 %v351, %v354
        %v356 = vmul.f32 %v321, %v222
        %357 = vrot.lane.b32.xlu0 %v356, 120
        %v358 = vpop.permute.xlu0 %357
        %v359 = vadd.f32 %v355, %v358
        %v360 = vadd.f32 %v300, %v346
        %361 = vst [vmem:[%s217] sm:$0x1] %v360
        %v363 = vrot.slane %v359, 1
        %v365 = vadd.f32 %v300, %v363
        %366 = vst [vmem:[%s217] sm:$0x80] %v365
        %s367 = sand.u32 %s111, 1
        %s368 = scalar_lea.sflag [#allocation4], %s367
        %s369 = sand.u32 %s111, 1
        %s370 = smul.addr %s369, 8
        %s371 = scalar_lea.vmem [#allocation7], %s370
        // Predicated region
        $region41: #{tpu_custom_call.1} parent=31 // pred_check
          %p372 = pneg %p121
        $region42: #{tpu_custom_call.1} parent=31 // pred_check_branch
          %374 = sbr.rel (%p372) target = $region44
        $region43: #{tpu_custom_call.1} parent=31 // pred_region
          %s376 = ssub.s32 128, 128
          %377 = vsyncadd %s368, %s376
          %s378 = smul.addr %s25, 2
          %s379 = sadd.s32 %s26, %s378
          %s380 = smul.addr %s379, 128
          %s381 = scalar_lea.hbm %s3, %s380
          %s383 = sshll.u32 %s371, 4
          %s384 = int_to_ptr.vmem [resolvable:$true] %s383
          %386 = dma.vmem_to_hbm [thread:$0]  %s384, 128, %s381, %s368
        $region44: #{tpu_custom_call.1} parent=31 // pred_fallthru
          _
      $region32: #{tpu_custom_call.1} parent=5 // pred_fallthru
        _
      %p387 = scmp.le.s32.totalorder 2, %s16
      // Predicated region
      $region45: #{tpu_custom_call.1} parent=5 // pred_check
        %p388 = pneg %p387
      $region46: #{tpu_custom_call.1} parent=5 // pred_check_branch
        %390 = sbr.rel (%p388) target = $region48
      $region47: #{tpu_custom_call.1} parent=5 // pred_region
        %s391 = ssub.s32 %s16, 2
        // Predicated region
        $region49: #{tpu_custom_call.1} parent=47 // pred_check
          %p392 = pneg %p127
        $region50: #{tpu_custom_call.1} parent=47 // pred_check_branch
          %394 = sbr.rel (%p392) target = $region52
        $region51: #{tpu_custom_call.1} parent=47 // pred_region
          %s395 = sand.u32 %s112, 1
          %s396 = scalar_lea.sflag [#allocation4], %s395
          %s397 = sand.u32 %s112, 1
          %s398 = smul.addr %s397, 8
          %s399 = scalar_lea.vmem [#allocation7], %s398
          %400 = dma.done %s396, 128
        $region52: #{tpu_custom_call.1} parent=47 // pred_fallthru
          _
      $region48: #{tpu_custom_call.1} parent=5 // pred_fallthru
        _
    $region6: #{tpu_custom_call.1} parent=1 // loop_footer
      %s20 = sadd.s32 1, %s16
    $region7: #{tpu_custom_call.1} parent=1 // loop_footer_branch
      %15 = sbr.rel target = $region3
    $region8: #{tpu_custom_call.1} parent=1 // loop_exit
      _
    %401 = vsyncpa [#allocation3], 1
    %s402 = scalar_lea.sflag [#allocation3], 1
    %403 = vsyncpa %s402, 1
    %404 = vsyncpa [#allocation6], 1
    %405 = vsyncpa [#allocation4], 1
    %s406 = scalar_lea.sflag [#allocation4], 1
    %407 = vsyncpa %s406, 1

</llo_original>
